<compile_context>
chip_gen: v7x
topology: tpu7x:2x2x1
jax: 0.10.0
libtpu: 0.0.40
codegen_flags: <defaults>
</compile_context>

<pallas_src>
import functools

import jax
import jax.numpy as jnp
from jax import lax
from jax.experimental import pallas as pl
from jax.experimental.pallas import tpu as pltpu


def _round_up(n, m):
    return ((n + m - 1) // m) * m


def _encoder_lstm_kernel(xt_ref, wih_ref, whh_ref, b_ref, wlin_ref, blin_ref,
                         out_ref, *, seq_len, reverse):
    """Fused LSTM encoder: hoisted input projection + unrolled recurrence + hid2lat.

    xt_ref  : (T*Bp, D1p)  time-major flattened input, row = t*Bp + b
    wih_ref : (D1p, 4H)    input->gates weights (transposed vs PyTorch, zero-padded rows)
    whh_ref : (H, 4H)      hidden->gates weights (transposed vs PyTorch)
    b_ref   : (1, 4H)      b_ih + b_hh
    wlin_ref: (H, Np)      hid2lat weight, lane-padded to Np = round_up(out_dim, 128)
    blin_ref: (1, Np)      hid2lat bias (lane padded)
    out_ref : (Bp, Np)     lane-dense padded output
    """
    Bp = out_ref.shape[0]
    G = whh_ref.shape[1]          # 4H
    H = G // 4
    T = seq_len

    # ---- Hoisted input projection: one MXU matmul covers every time step.
    gx = (jnp.dot(xt_ref[...], wih_ref[...], preferred_element_type=jnp.float32)
          + b_ref[...])                                          # (T*Bp, 4H)

    whh = whh_ref[...]

    # Cell-candidate block 'g' lives in lanes [2H, 3H) (PyTorch gate order i,f,g,o).
    lane = lax.broadcasted_iota(jnp.int32, (Bp, G), 1)
    is_g = (lane >= 2 * H) & (lane < 3 * H)

    # Real h / c live in lanes [0, H); remaining lanes are never consumed
    # (h is sliced to [:, :H] before any matmul).
    h = jnp.zeros((Bp, G), jnp.float32)
    c = jnp.zeros((Bp, G), jnp.float32)

    steps = range(T - 1, -1, -1) if reverse else range(T)
    for s in steps:                                    # fully unrolled, static indices
        gates = gx[s * Bp:(s + 1) * Bp, :] + jnp.dot(
            h[:, :H], whh, preferred_element_type=jnp.float32)
        # Full-vreg EUP activations + lane select (no narrow lane-offset slices).
        act = jnp.where(is_g, jnp.tanh(gates), jax.nn.sigmoid(gates))
        # act lane blocks = [ i | f | g | o ].  pltpu.roll == jnp.roll semantics:
        # result[j] = act[(j - shift) mod 4H] => shift 3H/2H/H brings f/g/o into [0,H).
        f_al = pltpu.roll(act, 3 * H, 1)
        g_al = pltpu.roll(act, 2 * H, 1)
        o_al = pltpu.roll(act, 1 * H, 1)
        c = f_al * c + act * g_al                      # lanes [0,H) = true cell state
        h = o_al * jnp.tanh(c)                         # lanes [0,H) = true hidden state

    # hid2lat, lane-dense (padded) store.
    out_ref[...] = (
        jnp.dot(h[:, :H], wlin_ref[...], preferred_element_type=jnp.float32)
        + blin_ref[...]
    )


def encoder_forward(x, t, params, latent_dim, variational=True, reverse=False):
    """x: (B, T, input_dim) f32; t: (B, T) f32."""
    x = x.astype(jnp.float32)
    t = t.astype(jnp.float32)
    B, T, D = x.shape
    H = params["w_hh"].shape[0]
    G = 4 * H
    Dout = params["w_lin"].shape[1]
    D1 = D + 1
    Bp = _round_up(B, 8)            # sublane tile
    D1p = _round_up(D1, 8)          # clean K dim for the hoisted matmul
    Np = _round_up(Dout, 128)       # lane-dense output

    # --- tiny packing glue (few KB; fused by XLA under jit) ---
    t_diff = jnp.concatenate(
        [jnp.zeros_like(t[:, :1]), t[:, 1:] - t[:, :-1]], axis=1)       # (B, T)
    xt = jnp.concatenate([x, t_diff[..., None]], axis=-1)               # (B, T, D1)
    xt_tm = jnp.transpose(xt, (1, 0, 2))                                # (T, B, D1)
    xt_tm = jnp.pad(xt_tm, ((0, 0), (0, Bp - B), (0, D1p - D1)))        # (T, Bp, D1p)
    xt_flat = xt_tm.reshape(T * Bp, D1p)

    wih_p = jnp.pad(params["w_ih"], ((0, D1p - D1), (0, 0)))            # zero rows: no-op
    wlin_p = jnp.pad(params["w_lin"], ((0, 0), (0, Np - Dout)))
    blin_p = jnp.pad(params["b_lin"], ((0, 0), (0, Np - Dout)))

    vmem = pl.BlockSpec(memory_space=pltpu.MemorySpace.VMEM)
    kernel = functools.partial(_encoder_lstm_kernel, seq_len=T, reverse=reverse)

    z0_pad = pl.pallas_call(
        kernel,
        out_shape=jax.ShapeDtypeStruct((Bp, Np), jnp.float32),
        in_specs=[vmem] * 6,
        out_specs=vmem,
    )(xt_flat, wih_p, params["w_hh"], params["b"], wlin_p, blin_p)

    z0 = z0_pad[:B, :Dout]
    if variational:
        return z0[:, :latent_dim], z0[:, latent_dim:]
    return z0[:, :latent_dim]


def init_encoder_params(key, input_dim, hidden_dim, latent_dim, variational=True):
    """Synthetic init matching PyTorch parameter shapes/scales
    (LSTM uniform(-1/sqrt(H), 1/sqrt(H)); Linear uniform(-1/sqrt(in), 1/sqrt(in)))."""
    d1 = input_dim + 1
    out_dim = 2 * latent_dim if variational else latent_dim
    k1, k2, k3, k4, k5, k6 = jax.random.split(key, 6)
    s_rnn = 1.0 / jnp.sqrt(hidden_dim)
    s_lin = 1.0 / jnp.sqrt(hidden_dim)
    # PyTorch stores (4H, D1)/(4H, H); we store transposed for right-multiplication.
    w_ih = jax.random.uniform(k1, (d1, 4 * hidden_dim), jnp.float32, -s_rnn, s_rnn)
    w_hh = jax.random.uniform(k2, (hidden_dim, 4 * hidden_dim), jnp.float32, -s_rnn, s_rnn)
    b_ih = jax.random.uniform(k3, (4 * hidden_dim,), jnp.float32, -s_rnn, s_rnn)
    b_hh = jax.random.uniform(k4, (4 * hidden_dim,), jnp.float32, -s_rnn, s_rnn)
    w_lin = jax.random.uniform(k5, (hidden_dim, out_dim), jnp.float32, -s_lin, s_lin)
    b_lin = jax.random.uniform(k6, (out_dim,), jnp.float32, -s_lin, s_lin)
    return {
        "w_ih": w_ih,
        "w_hh": w_hh,
        "b": (b_ih + b_hh)[None, :],
        "w_lin": w_lin,
        "b_lin": b_lin[None, :],
    }


def _encoder_ref(x, t, params, latent_dim, variational=True, reverse=False):
    """Pure-JAX reference mirroring the PyTorch Encoder forward."""
    t_diff = jnp.concatenate(
        [jnp.zeros_like(t[:, :1]), t[:, 1:] - t[:, :-1]], axis=1)
    xt = jnp.concatenate([x, t_diff[..., None]], axis=-1)
    if reverse:
        xt = xt[:, ::-1, :]
    B, T, _ = xt.shape
    H = params["w_hh"].shape[0]
    h = jnp.zeros((B, H), jnp.float32)
    c = jnp.zeros((B, H), jnp.float32)
    for s in range(T):
        g = xt[:, s, :] @ params["w_ih"] + h @ params["w_hh"] + params["b"]
        i_g = jax.nn.sigmoid(g[:, :H])
        f_g = jax.nn.sigmoid(g[:, H:2 * H])
        g_g = jnp.tanh(g[:, 2 * H:3 * H])
        o_g = jax.nn.sigmoid(g[:, 3 * H:])
        c = f_g * c + i_g * g_g
        h = o_g * jnp.tanh(c)
    z0 = h @ params["w_lin"] + params["b_lin"]
    if variational:
        return z0[:, :latent_dim], z0[:, latent_dim:]
    return z0[:, :latent_dim]


if __name__ == "__main__":
    B, T = 2, 8
    input_dim, hidden_dim, latent_dim = 4, 32, 8
    variational = True

    key = jax.random.PRNGKey(0)
    kx, kt, kp = jax.random.split(key, 3)
    x = jax.random.normal(kx, (B, T, input_dim), jnp.float32)
    # monotonically increasing time stamps per sample
    t = jnp.cumsum(jax.random.uniform(kt, (B, T), jnp.float32, 0.1, 1.0), axis=1)

    params = init_encoder_params(kp, input_dim, hidden_dim, latent_dim, variational)

    fwd = jax.jit(lambda x_, t_, p_: encoder_forward(
        x_, t_, p_, latent_dim, variational=True, reverse=False))
    z0_mean, z0_log_var = fwd(x, t, params)
    jax.block_until_ready((z0_mean, z0_log_var))
    assert z0_mean.shape == (B, latent_dim)
    assert z0_log_var.shape == (B, latent_dim)

    # Verify against a pure-JAX reference of the PyTorch forward.
    ref_mean, ref_log_var = _encoder_ref(x, t, params, latent_dim, True, False)
    err = max(float(jnp.max(jnp.abs(z0_mean - ref_mean))),
              float(jnp.max(jnp.abs(z0_log_var - ref_log_var))))
    assert err < 3e-2, f"kernel/reference mismatch: max abs err = {err}"

    print("KERNEL_OK")
</pallas_src>

<mosaic_0001>
module attributes {stable_mosaic.version = 11 : i64} {
  func.func @_encoder_lstm_kernel(%arg0: memref<64x8xf32, #tpu.memory_space<vmem>>, %arg1: memref<8x128xf32, #tpu.memory_space<vmem>>, %arg2: memref<32x128xf32, #tpu.memory_space<vmem>>, %arg3: memref<1x128xf32, #tpu.memory_space<vmem>>, %arg4: memref<32x128xf32, #tpu.memory_space<vmem>>, %arg5: memref<1x128xf32, #tpu.memory_space<vmem>>, %arg6: memref<8x128xf32, #tpu.memory_space<vmem>>) attributes {dimension_semantics = [], scalar_prefetch = 0 : i64, scratch_operands = 0 : i64, tpu.core_type = #tpu.core_type<tc>} {
    %c0 = arith.constant 0 : index
    %c0_0 = arith.constant 0 : index
    %0 = vector.load %arg0[%c0, %c0_0] : memref<64x8xf32, #tpu.memory_space<vmem>>, vector<64x8xf32>
    %c0_1 = arith.constant 0 : index
    %c0_2 = arith.constant 0 : index
    %1 = vector.load %arg1[%c0_1, %c0_2] : memref<8x128xf32, #tpu.memory_space<vmem>>, vector<8x128xf32>
    %cst = arith.constant dense<0.000000e+00> : vector<64x128xf32>
    %2 = tpu.matmul %0, %1, %cst {dimension_numbers = #tpu.dot_dimension_numbers<[1], [0], [0], [1], [0, 0, 1, 1], [], []>} : vector<64x8xf32>, vector<8x128xf32>, vector<64x128xf32> -> vector<64x128xf32>
    %c0_3 = arith.constant 0 : index
    %c0_4 = arith.constant 0 : index
    %3 = vector.load %arg3[%c0_3, %c0_4] : memref<1x128xf32, #tpu.memory_space<vmem>>, vector<1x128xf32>
    %4 = vector.broadcast %3 : vector<1x128xf32> to vector<64x128xf32>
    %5 = arith.addf %2, %4 : vector<64x128xf32>
    %c0_5 = arith.constant 0 : index
    %c0_6 = arith.constant 0 : index
    %6 = vector.load %arg2[%c0_5, %c0_6] : memref<32x128xf32, #tpu.memory_space<vmem>>, vector<32x128xf32>
    %7 = tpu.iota {dimensions = array<i32: 1>} : vector<8x128xi32>
    %c64_i32 = arith.constant 64 : i32
    %8 = vector.broadcast %c64_i32 : i32 to vector<8x128xi32>
    %9 = arith.cmpi sge, %7, %8 : vector<8x128xi32>
    %c96_i32 = arith.constant 96 : i32
    %10 = vector.broadcast %c96_i32 : i32 to vector<8x128xi32>
    %11 = arith.cmpi slt, %7, %10 : vector<8x128xi32>
    %12 = arith.andi %9, %11 : vector<8x128xi1>
    %cst_7 = arith.constant 0.000000e+00 : f32
    %13 = vector.broadcast %cst_7 : f32 to vector<8x128xf32>
    %cst_8 = arith.constant 0.000000e+00 : f32
    %14 = vector.broadcast %cst_8 : f32 to vector<8x128xf32>
    %15 = vector.extract_strided_slice %5 {offsets = [0, 0], sizes = [8, 128], strides = [1, 1]} : vector<64x128xf32> to vector<8x128xf32>
    %16 = vector.extract_strided_slice %13 {offsets = [0, 0], sizes = [8, 32], strides = [1, 1]} : vector<8x128xf32> to vector<8x32xf32>
    %cst_9 = arith.constant dense<0.000000e+00> : vector<8x128xf32>
    %17 = tpu.matmul %16, %6, %cst_9 {dimension_numbers = #tpu.dot_dimension_numbers<[1], [0], [0], [1], [0, 0, 1, 1], [], []>} : vector<8x32xf32>, vector<32x128xf32>, vector<8x128xf32> -> vector<8x128xf32>
    %18 = arith.addf %15, %17 : vector<8x128xf32>
    %19 = math.tanh %18 : vector<8x128xf32>
    %20 = arith.negf %18 : vector<8x128xf32>
    %21 = math.exp %20 : vector<8x128xf32>
    %cst_10 = arith.constant 1.000000e+00 : f32
    %22 = vector.broadcast %cst_10 : f32 to vector<8x128xf32>
    %23 = arith.addf %22, %21 : vector<8x128xf32>
    %24 = arith.divf %22, %23 : vector<8x128xf32>
    %25 = arith.select %12, %19, %24 : vector<8x128xi1>, vector<8x128xf32>
    %c96_i32_11 = arith.constant 96 : i32
    %26 = tpu.dynamic_rotate %25 by %c96_i32_11 dim 1 : vector<8x128xf32>, i32 -> vector<8x128xf32>
    %c64_i32_12 = arith.constant 64 : i32
    %27 = tpu.dynamic_rotate %25 by %c64_i32_12 dim 1 : vector<8x128xf32>, i32 -> vector<8x128xf32>
    %c32_i32 = arith.constant 32 : i32
    %28 = tpu.dynamic_rotate %25 by %c32_i32 dim 1 : vector<8x128xf32>, i32 -> vector<8x128xf32>
    %29 = arith.mulf %26, %14 : vector<8x128xf32>
    %30 = arith.mulf %25, %27 : vector<8x128xf32>
    %31 = arith.addf %29, %30 : vector<8x128xf32>
    %32 = math.tanh %31 : vector<8x128xf32>
    %33 = arith.mulf %28, %32 : vector<8x128xf32>
    %34 = vector.extract_strided_slice %5 {offsets = [8, 0], sizes = [8, 128], strides = [1, 1]} : vector<64x128xf32> to vector<8x128xf32>
    %35 = vector.extract_strided_slice %33 {offsets = [0, 0], sizes = [8, 32], strides = [1, 1]} : vector<8x128xf32> to vector<8x32xf32>
    %cst_13 = arith.constant dense<0.000000e+00> : vector<8x128xf32>
    %36 = tpu.matmul %35, %6, %cst_13 {dimension_numbers = #tpu.dot_dimension_numbers<[1], [0], [0], [1], [0, 0, 1, 1], [], []>} : vector<8x32xf32>, vector<32x128xf32>, vector<8x128xf32> -> vector<8x128xf32>
    %37 = arith.addf %34, %36 : vector<8x128xf32>
    %38 = math.tanh %37 : vector<8x128xf32>
    %39 = arith.negf %37 : vector<8x128xf32>
    %40 = math.exp %39 : vector<8x128xf32>
    %cst_14 = arith.constant 1.000000e+00 : f32
    %41 = vector.broadcast %cst_14 : f32 to vector<8x128xf32>
    %42 = arith.addf %41, %40 : vector<8x128xf32>
    %43 = arith.divf %41, %42 : vector<8x128xf32>
    %44 = arith.select %12, %38, %43 : vector<8x128xi1>, vector<8x128xf32>
    %c96_i32_15 = arith.constant 96 : i32
    %45 = tpu.dynamic_rotate %44 by %c96_i32_15 dim 1 : vector<8x128xf32>, i32 -> vector<8x128xf32>
    %c64_i32_16 = arith.constant 64 : i32
    %46 = tpu.dynamic_rotate %44 by %c64_i32_16 dim 1 : vector<8x128xf32>, i32 -> vector<8x128xf32>
    %c32_i32_17 = arith.constant 32 : i32
    %47 = tpu.dynamic_rotate %44 by %c32_i32_17 dim 1 : vector<8x128xf32>, i32 -> vector<8x128xf32>
    %48 = arith.mulf %45, %31 : vector<8x128xf32>
    %49 = arith.mulf %44, %46 : vector<8x128xf32>
    %50 = arith.addf %48, %49 : vector<8x128xf32>
    %51 = math.tanh %50 : vector<8x128xf32>
    %52 = arith.mulf %47, %51 : vector<8x128xf32>
    %53 = vector.extract_strided_slice %5 {offsets = [16, 0], sizes = [8, 128], strides = [1, 1]} : vector<64x128xf32> to vector<8x128xf32>
    %54 = vector.extract_strided_slice %52 {offsets = [0, 0], sizes = [8, 32], strides = [1, 1]} : vector<8x128xf32> to vector<8x32xf32>
    %cst_18 = arith.constant dense<0.000000e+00> : vector<8x128xf32>
    %55 = tpu.matmul %54, %6, %cst_18 {dimension_numbers = #tpu.dot_dimension_numbers<[1], [0], [0], [1], [0, 0, 1, 1], [], []>} : vector<8x32xf32>, vector<32x128xf32>, vector<8x128xf32> -> vector<8x128xf32>
    %56 = arith.addf %53, %55 : vector<8x128xf32>
    %57 = math.tanh %56 : vector<8x128xf32>
    %58 = arith.negf %56 : vector<8x128xf32>
    %59 = math.exp %58 : vector<8x128xf32>
    %cst_19 = arith.constant 1.000000e+00 : f32
    %60 = vector.broadcast %cst_19 : f32 to vector<8x128xf32>
    %61 = arith.addf %60, %59 : vector<8x128xf32>
    %62 = arith.divf %60, %61 : vector<8x128xf32>
    %63 = arith.select %12, %57, %62 : vector<8x128xi1>, vector<8x128xf32>
    %c96_i32_20 = arith.constant 96 : i32
    %64 = tpu.dynamic_rotate %63 by %c96_i32_20 dim 1 : vector<8x128xf32>, i32 -> vector<8x128xf32>
    %c64_i32_21 = arith.constant 64 : i32
    %65 = tpu.dynamic_rotate %63 by %c64_i32_21 dim 1 : vector<8x128xf32>, i32 -> vector<8x128xf32>
    %c32_i32_22 = arith.constant 32 : i32
    %66 = tpu.dynamic_rotate %63 by %c32_i32_22 dim 1 : vector<8x128xf32>, i32 -> vector<8x128xf32>
    %67 = arith.mulf %64, %50 : vector<8x128xf32>
    %68 = arith.mulf %63, %65 : vector<8x128xf32>
    %69 = arith.addf %67, %68 : vector<8x128xf32>
    %70 = math.tanh %69 : vector<8x128xf32>
    %71 = arith.mulf %66, %70 : vector<8x128xf32>
    %72 = vector.extract_strided_slice %5 {offsets = [24, 0], sizes = [8, 128], strides = [1, 1]} : vector<64x128xf32> to vector<8x128xf32>
    %73 = vector.extract_strided_slice %71 {offsets = [0, 0], sizes = [8, 32], strides = [1, 1]} : vector<8x128xf32> to vector<8x32xf32>
    %cst_23 = arith.constant dense<0.000000e+00> : vector<8x128xf32>
    %74 = tpu.matmul %73, %6, %cst_23 {dimension_numbers = #tpu.dot_dimension_numbers<[1], [0], [0], [1], [0, 0, 1, 1], [], []>} : vector<8x32xf32>, vector<32x128xf32>, vector<8x128xf32> -> vector<8x128xf32>
    %75 = arith.addf %72, %74 : vector<8x128xf32>
    %76 = math.tanh %75 : vector<8x128xf32>
    %77 = arith.negf %75 : vector<8x128xf32>
    %78 = math.exp %77 : vector<8x128xf32>
    %cst_24 = arith.constant 1.000000e+00 : f32
    %79 = vector.broadcast %cst_24 : f32 to vector<8x128xf32>
    %80 = arith.addf %79, %78 : vector<8x128xf32>
    %81 = arith.divf %79, %80 : vector<8x128xf32>
    %82 = arith.select %12, %76, %81 : vector<8x128xi1>, vector<8x128xf32>
    %c96_i32_25 = arith.constant 96 : i32
    %83 = tpu.dynamic_rotate %82 by %c96_i32_25 dim 1 : vector<8x128xf32>, i32 -> vector<8x128xf32>
    %c64_i32_26 = arith.constant 64 : i32
    %84 = tpu.dynamic_rotate %82 by %c64_i32_26 dim 1 : vector<8x128xf32>, i32 -> vector<8x128xf32>
    %c32_i32_27 = arith.constant 32 : i32
    %85 = tpu.dynamic_rotate %82 by %c32_i32_27 dim 1 : vector<8x128xf32>, i32 -> vector<8x128xf32>
    %86 = arith.mulf %83, %69 : vector<8x128xf32>
    %87 = arith.mulf %82, %84 : vector<8x128xf32>
    %88 = arith.addf %86, %87 : vector<8x128xf32>
    %89 = math.tanh %88 : vector<8x128xf32>
    %90 = arith.mulf %85, %89 : vector<8x128xf32>
    %91 = vector.extract_strided_slice %5 {offsets = [32, 0], sizes = [8, 128], strides = [1, 1]} : vector<64x128xf32> to vector<8x128xf32>
    %92 = vector.extract_strided_slice %90 {offsets = [0, 0], sizes = [8, 32], strides = [1, 1]} : vector<8x128xf32> to vector<8x32xf32>
    %cst_28 = arith.constant dense<0.000000e+00> : vector<8x128xf32>
    %93 = tpu.matmul %92, %6, %cst_28 {dimension_numbers = #tpu.dot_dimension_numbers<[1], [0], [0], [1], [0, 0, 1, 1], [], []>} : vector<8x32xf32>, vector<32x128xf32>, vector<8x128xf32> -> vector<8x128xf32>
    %94 = arith.addf %91, %93 : vector<8x128xf32>
    %95 = math.tanh %94 : vector<8x128xf32>
    %96 = arith.negf %94 : vector<8x128xf32>
    %97 = math.exp %96 : vector<8x128xf32>
    %cst_29 = arith.constant 1.000000e+00 : f32
    %98 = vector.broadcast %cst_29 : f32 to vector<8x128xf32>
    %99 = arith.addf %98, %97 : vector<8x128xf32>
    %100 = arith.divf %98, %99 : vector<8x128xf32>
    %101 = arith.select %12, %95, %100 : vector<8x128xi1>, vector<8x128xf32>
    %c96_i32_30 = arith.constant 96 : i32
    %102 = tpu.dynamic_rotate %101 by %c96_i32_30 dim 1 : vector<8x128xf32>, i32 -> vector<8x128xf32>
    %c64_i32_31 = arith.constant 64 : i32
    %103 = tpu.dynamic_rotate %101 by %c64_i32_31 dim 1 : vector<8x128xf32>, i32 -> vector<8x128xf32>
    %c32_i32_32 = arith.constant 32 : i32
    %104 = tpu.dynamic_rotate %101 by %c32_i32_32 dim 1 : vector<8x128xf32>, i32 -> vector<8x128xf32>
    %105 = arith.mulf %102, %88 : vector<8x128xf32>
    %106 = arith.mulf %101, %103 : vector<8x128xf32>
    %107 = arith.addf %105, %106 : vector<8x128xf32>
    %108 = math.tanh %107 : vector<8x128xf32>
    %109 = arith.mulf %104, %108 : vector<8x128xf32>
    %110 = vector.extract_strided_slice %5 {offsets = [40, 0], sizes = [8, 128], strides = [1, 1]} : vector<64x128xf32> to vector<8x128xf32>
    %111 = vector.extract_strided_slice %109 {offsets = [0, 0], sizes = [8, 32], strides = [1, 1]} : vector<8x128xf32> to vector<8x32xf32>
    %cst_33 = arith.constant dense<0.000000e+00> : vector<8x128xf32>
    %112 = tpu.matmul %111, %6, %cst_33 {dimension_numbers = #tpu.dot_dimension_numbers<[1], [0], [0], [1], [0, 0, 1, 1], [], []>} : vector<8x32xf32>, vector<32x128xf32>, vector<8x128xf32> -> vector<8x128xf32>
    %113 = arith.addf %110, %112 : vector<8x128xf32>
    %114 = math.tanh %113 : vector<8x128xf32>
    %115 = arith.negf %113 : vector<8x128xf32>
    %116 = math.exp %115 : vector<8x128xf32>
    %cst_34 = arith.constant 1.000000e+00 : f32
    %117 = vector.broadcast %cst_34 : f32 to vector<8x128xf32>
    %118 = arith.addf %117, %116 : vector<8x128xf32>
    %119 = arith.divf %117, %118 : vector<8x128xf32>
    %120 = arith.select %12, %114, %119 : vector<8x128xi1>, vector<8x128xf32>
    %c96_i32_35 = arith.constant 96 : i32
    %121 = tpu.dynamic_rotate %120 by %c96_i32_35 dim 1 : vector<8x128xf32>, i32 -> vector<8x128xf32>
    %c64_i32_36 = arith.constant 64 : i32
    %122 = tpu.dynamic_rotate %120 by %c64_i32_36 dim 1 : vector<8x128xf32>, i32 -> vector<8x128xf32>
    %c32_i32_37 = arith.constant 32 : i32
    %123 = tpu.dynamic_rotate %120 by %c32_i32_37 dim 1 : vector<8x128xf32>, i32 -> vector<8x128xf32>
    %124 = arith.mulf %121, %107 : vector<8x128xf32>
    %125 = arith.mulf %120, %122 : vector<8x128xf32>
    %126 = arith.addf %124, %125 : vector<8x128xf32>
    %127 = math.tanh %126 : vector<8x128xf32>
    %128 = arith.mulf %123, %127 : vector<8x128xf32>
    %129 = vector.extract_strided_slice %5 {offsets = [48, 0], sizes = [8, 128], strides = [1, 1]} : vector<64x128xf32> to vector<8x128xf32>
    %130 = vector.extract_strided_slice %128 {offsets = [0, 0], sizes = [8, 32], strides = [1, 1]} : vector<8x128xf32> to vector<8x32xf32>
    %cst_38 = arith.constant dense<0.000000e+00> : vector<8x128xf32>
    %131 = tpu.matmul %130, %6, %cst_38 {dimension_numbers = #tpu.dot_dimension_numbers<[1], [0], [0], [1], [0, 0, 1, 1], [], []>} : vector<8x32xf32>, vector<32x128xf32>, vector<8x128xf32> -> vector<8x128xf32>
    %132 = arith.addf %129, %131 : vector<8x128xf32>
    %133 = math.tanh %132 : vector<8x128xf32>
    %134 = arith.negf %132 : vector<8x128xf32>
    %135 = math.exp %134 : vector<8x128xf32>
    %cst_39 = arith.constant 1.000000e+00 : f32
    %136 = vector.broadcast %cst_39 : f32 to vector<8x128xf32>
    %137 = arith.addf %136, %135 : vector<8x128xf32>
    %138 = arith.divf %136, %137 : vector<8x128xf32>
    %139 = arith.select %12, %133, %138 : vector<8x128xi1>, vector<8x128xf32>
    %c96_i32_40 = arith.constant 96 : i32
    %140 = tpu.dynamic_rotate %139 by %c96_i32_40 dim 1 : vector<8x128xf32>, i32 -> vector<8x128xf32>
    %c64_i32_41 = arith.constant 64 : i32
    %141 = tpu.dynamic_rotate %139 by %c64_i32_41 dim 1 : vector<8x128xf32>, i32 -> vector<8x128xf32>
    %c32_i32_42 = arith.constant 32 : i32
    %142 = tpu.dynamic_rotate %139 by %c32_i32_42 dim 1 : vector<8x128xf32>, i32 -> vector<8x128xf32>
    %143 = arith.mulf %140, %126 : vector<8x128xf32>
    %144 = arith.mulf %139, %141 : vector<8x128xf32>
    %145 = arith.addf %143, %144 : vector<8x128xf32>
    %146 = math.tanh %145 : vector<8x128xf32>
    %147 = arith.mulf %142, %146 : vector<8x128xf32>
    %148 = vector.extract_strided_slice %5 {offsets = [56, 0], sizes = [8, 128], strides = [1, 1]} : vector<64x128xf32> to vector<8x128xf32>
    %149 = vector.extract_strided_slice %147 {offsets = [0, 0], sizes = [8, 32], strides = [1, 1]} : vector<8x128xf32> to vector<8x32xf32>
    %cst_43 = arith.constant dense<0.000000e+00> : vector<8x128xf32>
    %150 = tpu.matmul %149, %6, %cst_43 {dimension_numbers = #tpu.dot_dimension_numbers<[1], [0], [0], [1], [0, 0, 1, 1], [], []>} : vector<8x32xf32>, vector<32x128xf32>, vector<8x128xf32> -> vector<8x128xf32>
    %151 = arith.addf %148, %150 : vector<8x128xf32>
    %152 = math.tanh %151 : vector<8x128xf32>
    %153 = arith.negf %151 : vector<8x128xf32>
    %154 = math.exp %153 : vector<8x128xf32>
    %cst_44 = arith.constant 1.000000e+00 : f32
    %155 = vector.broadcast %cst_44 : f32 to vector<8x128xf32>
    %156 = arith.addf %155, %154 : vector<8x128xf32>
    %157 = arith.divf %155, %156 : vector<8x128xf32>
    %158 = arith.select %12, %152, %157 : vector<8x128xi1>, vector<8x128xf32>
    %c96_i32_45 = arith.constant 96 : i32
    %159 = tpu.dynamic_rotate %158 by %c96_i32_45 dim 1 : vector<8x128xf32>, i32 -> vector<8x128xf32>
    %c64_i32_46 = arith.constant 64 : i32
    %160 = tpu.dynamic_rotate %158 by %c64_i32_46 dim 1 : vector<8x128xf32>, i32 -> vector<8x128xf32>
    %c32_i32_47 = arith.constant 32 : i32
    %161 = tpu.dynamic_rotate %158 by %c32_i32_47 dim 1 : vector<8x128xf32>, i32 -> vector<8x128xf32>
    %162 = arith.mulf %159, %145 : vector<8x128xf32>
    %163 = arith.mulf %158, %160 : vector<8x128xf32>
    %164 = arith.addf %162, %163 : vector<8x128xf32>
    %165 = math.tanh %164 : vector<8x128xf32>
    %166 = arith.mulf %161, %165 : vector<8x128xf32>
    %167 = vector.extract_strided_slice %166 {offsets = [0, 0], sizes = [8, 32], strides = [1, 1]} : vector<8x128xf32> to vector<8x32xf32>
    %c0_48 = arith.constant 0 : index
    %c0_49 = arith.constant 0 : index
    %168 = vector.load %arg4[%c0_48, %c0_49] : memref<32x128xf32, #tpu.memory_space<vmem>>, vector<32x128xf32>
    %cst_50 = arith.constant dense<0.000000e+00> : vector<8x128xf32>
    %169 = tpu.matmul %167, %168, %cst_50 {dimension_numbers = #tpu.dot_dimension_numbers<[1], [0], [0], [1], [0, 0, 1, 1], [], []>} : vector<8x32xf32>, vector<32x128xf32>, vector<8x128xf32> -> vector<8x128xf32>
    %c0_51 = arith.constant 0 : index
    %c0_52 = arith.constant 0 : index
    %170 = vector.load %arg5[%c0_51, %c0_52] : memref<1x128xf32, #tpu.memory_space<vmem>>, vector<1x128xf32>
    %171 = vector.broadcast %170 : vector<1x128xf32> to vector<8x128xf32>
    %172 = arith.addf %169, %171 : vector<8x128xf32>
    %c0_53 = arith.constant 0 : index
    %c0_54 = arith.constant 0 : index
    %173 = vector.load %arg6[%c0_53, %c0_54] : memref<8x128xf32, #tpu.memory_space<vmem>>, vector<8x128xf32>
    tpu.vector_store %arg6[%c0_53, %c0_54], %172 {strides = array<i32>} : memref<8x128xf32, #tpu.memory_space<vmem>>, vector<8x128xf32>,
    return
  }
}

</mosaic_0001>

<llo_original>
// kernel: _lambda_.1
$region0: #{_lambda_.1}
  #allocation0 [shape = 'u32[]', space=smem, size = 0x4, offset = 0x4, fixed_abs, tag = 'smem constant byte address 0x4 - core index']
  #allocation1 [shape = 'u32[144,128]{1,0:T(1,128)}', space=vmem, size = 0x12000, scoped, tag = 'internal scratch']
  %s0 = inlined_call_operand.vmem [shape: f32[64,8], index: 0, kind: input, shape index: {}]
  %s1 = inlined_call_operand.vmem [shape: f32[8,128], index: 1, kind: input, shape index: {}]
  %s2 = inlined_call_operand.vmem [shape: f32[32,128], index: 2, kind: input, shape index: {}]
  %s3 = inlined_call_operand.vmem [shape: f32[1,128], index: 3, kind: input, shape index: {}]
  %s4 = inlined_call_operand.vmem [shape: f32[32,128], index: 4, kind: input, shape index: {}]
  %s5 = inlined_call_operand.vmem [shape: f32[1,128], index: 5, kind: input, shape index: {}]
  %s6 = inlined_call_operand.vmem [shape: f32[8,128], index: 6, kind: output, shape index: {}]
  %s7 = sld [smem:[#allocation0]]
  $region34: #{_lambda_.1} parent=0
    _
  %s9 = ssub.s32 1, %s7
  %s10 = scalar_select 0, %s9, %s7
  // Predicated region
  $region2: #{_lambda_.1} parent=0 // pred_check
    _
  $region3: #{_lambda_.1} parent=0 // pred_check_branch
    %12 = sbr.rel (0) target = $region5
  $region4: #{_lambda_.1} parent=0 // pred_region
    _
  $region5: #{_lambda_.1} parent=0 // pred_fallthru
    _
  // Predicated region
  $region6: #{_lambda_.1} parent=0 // pred_check
    _
  $region7: #{_lambda_.1} parent=0 // pred_check_branch
    %14 = sbr.rel (0) target = $region9
  $region8: #{_lambda_.1} parent=0 // pred_region
    _
  $region9: #{_lambda_.1} parent=0 // pred_fallthru
    _
  // Predicated region
  $region10: #{_lambda_.1} parent=0 // pred_check
    _
  $region11: #{_lambda_.1} parent=0 // pred_check_branch
    %16 = sbr.rel (0) target = $region13
  $region12: #{_lambda_.1} parent=0 // pred_region
    _
  $region13: #{_lambda_.1} parent=0 // pred_fallthru
    _
  // Predicated region
  $region14: #{_lambda_.1} parent=0 // pred_check
    _
  $region15: #{_lambda_.1} parent=0 // pred_check_branch
    %18 = sbr.rel (0) target = $region17
  $region16: #{_lambda_.1} parent=0 // pred_region
    _
  $region17: #{_lambda_.1} parent=0 // pred_fallthru
    _
  // Predicated region
  $region18: #{_lambda_.1} parent=0 // pred_check
    _
  $region19: #{_lambda_.1} parent=0 // pred_check_branch
    %20 = sbr.rel (0) target = $region21
  $region20: #{_lambda_.1} parent=0 // pred_region
    _
  $region21: #{_lambda_.1} parent=0 // pred_fallthru
    _
  // Predicated region
  $region22: #{_lambda_.1} parent=0 // pred_check
    _
  $region23: #{_lambda_.1} parent=0 // pred_check_branch
    %22 = sbr.rel (0) target = $region25
  $region24: #{_lambda_.1} parent=0 // pred_region
    _
  $region25: #{_lambda_.1} parent=0 // pred_fallthru
    _
  %v23 = vld [vmem:[%s0] sm:$0xff]
  %v24 = vld [vmem:[%s0 + $0x8] sm:$0xff]
  %v25 = vld [vmem:[%s0 + $0x10] sm:$0xff]
  %v26 = vld [vmem:[%s0 + $0x18] sm:$0xff]
  %v27 = vld [vmem:[%s0 + $0x20] sm:$0xff]
  %v28 = vld [vmem:[%s0 + $0x28] sm:$0xff]
  %v29 = vld [vmem:[%s0 + $0x30] sm:$0xff]
  %v30 = vld [vmem:[%s0 + $0x38] sm:$0xff]
  %v31 = vld [vmem:[%s1] sm:$0xff]
  %v32 = vld [vmem:[%s3] sm:$0x1]
  %v34 = vlaneseq
  %v35 = vshrl.u32 %v34, 7
  %v36 = vsub.s32 0, %v35
  %v37 = vrot.slane %v32, %v36
  %vm39 = vcmask 64512
  %v41 = vsel %vm39, %v23, 0
  %v44 = vsel %vm39, %v24, 0
  %v47 = vsel %vm39, %v25, 0
  %v50 = vsel %vm39, %v26, 0
  %v53 = vsel %vm39, %v27, 0
  %v56 = vsel %vm39, %v28, 0
  %v59 = vsel %vm39, %v29, 0
  %v62 = vsel %vm39, %v30, 0
  %64 = vmatprep.subr.mxu0 0.0
  %65 = vmatpush1.msra.mxu0 %v31
  %66 = vmatprep.subr.mxu0 0.0
  %67 = vmatpush1.msra.mxu0 0.0
  %68 = vmatprep.subr.mxu0 0.0
  %69 = vmatpush1.msra.mxu0 0.0
  %70 = vmatprep.subr.mxu0 0.0
  %71 = vmatpush1.msra.mxu0 0.0
  %72 = vmatprep.subr.mxu0 0.0
  %73 = vmatpush1.msra.mxu0 0.0
  %74 = vmatprep.subr.mxu0 0.0
  %75 = vmatpush1.msra.mxu0 0.0
  %76 = vmatprep.subr.mxu0 0.0
  %77 = vmatpush1.msra.mxu0 0.0
  %78 = vmatprep.subr.mxu0 0.0
  %79 = vmatpush1.msra.mxu0 0.0
  %80 = vmatprep.subr.mxu0 0.0
  %81 = vmatpush1.msra.mxu0 0.0
  %82 = vmatprep.subr.mxu0 0.0
  %83 = vmatpush1.msra.mxu0 0.0
  %84 = vmatprep.subr.mxu0 0.0
  %85 = vmatpush1.msra.mxu0 0.0
  %86 = vmatprep.subr.mxu0 0.0
  %87 = vmatpush1.msra.mxu0 0.0
  %88 = vmatprep.subr.mxu0 0.0
  %89 = vmatpush1.msra.mxu0 0.0
  %90 = vmatprep.subr.mxu0 0.0
  %91 = vmatpush1.msra.mxu0 0.0
  %92 = vmatprep.subr.mxu0 0.0
  %93 = vmatpush1.msra.mxu0 0.0
  %94 = vmatprep.subr.mxu0 0.0
  %95 = vmatpush1.msra.mxu0 0.0
  %96 = vmatprep.subr.mxu0 0.0
  %97 = vmatpush1.msra.mxu0 0.0
  %98 = vmatprep.subr.mxu0 0.0
  %99 = vmatpush1.msra.mxu0 0.0
  %100 = vmatprep.subr.mxu0 0.0
  %101 = vmatpush1.msra.mxu0 0.0
  %102 = vmatprep.subr.mxu0 0.0
  %103 = vmatpush1.msra.mxu0 0.0
  %104 = vmatprep.subr.mxu0 0.0
  %105 = vmatpush1.msra.mxu0 0.0
  %106 = vmatprep.subr.mxu0 0.0
  %107 = vmatpush1.msra.mxu0 0.0
  %108 = vmatprep.subr.mxu0 0.0
  %109 = vmatpush1.msra.mxu0 0.0
  %110 = vmatprep.subr.mxu0 0.0
  %111 = vmatpush1.msra.mxu0 0.0
  %112 = vmatprep.subr.mxu0 0.0
  %113 = vmatpush1.msra.mxu0 0.0
  %114 = vmatprep.subr.mxu0 0.0
  %115 = vmatpush1.msra.mxu0 0.0
  %116 = vmatprep.subr.mxu0 0.0
  %117 = vmatpush1.msra.mxu0 0.0
  %118 = vmatprep.subr.mxu0 0.0
  %119 = vmatpush1.msra.mxu0 0.0
  %120 = vmatprep.subr.mxu0 0.0
  %121 = vmatpush1.msra.mxu0 0.0
  %122 = vmatprep.subr.mxu0 0.0
  %123 = vmatpush1.msra.mxu0 0.0
  %124 = vmatprep.subr.mxu0 0.0
  %125 = vmatpush1.msra.mxu0 0.0
  %126 = vmatprep.subr.mxu0 0.0
  %127 = vmatpush1.msra.mxu0 0.0
  %128 = vmatprep.mubr.f32.mxu0 0.0
  %129 = vmatmul.mubr.f32.gmra.mrb[0].mxu0 %v41
  %v130 = vpop.f32.mrb[0].mxu0
  %v131 = vadd.f32 %v37, %v130
  %v132 = vpop.f32.mrb[0].mxu0
  %133 = vmatprep.mubr.f32.mxu0 0.0
  %134 = vmatmul.mubr.f32.gmra.mrb[0].mxu0 %v44
  %v135 = vpop.f32.mrb[0].mxu0
  %v136 = vadd.f32 %v37, %v135
  %v137 = vpop.f32.mrb[0].mxu0
  %138 = vmatprep.mubr.f32.mxu0 0.0
  %139 = vmatmul.mubr.f32.gmra.mrb[0].mxu0 %v47
  %v140 = vpop.f32.mrb[0].mxu0
  %v141 = vadd.f32 %v37, %v140
  %v142 = vpop.f32.mrb[0].mxu0
  %143 = vmatprep.mubr.f32.mxu0 0.0
  %144 = vmatmul.mubr.f32.gmra.mrb[0].mxu0 %v50
  %v145 = vpop.f32.mrb[0].mxu0
  %v146 = vadd.f32 %v37, %v145
  %v147 = vpop.f32.mrb[0].mxu0
  %148 = vmatprep.mubr.f32.mxu0 0.0
  %149 = vmatmul.mubr.f32.gmra.mrb[0].mxu0 %v53
  %v150 = vpop.f32.mrb[0].mxu0
  %v151 = vadd.f32 %v37, %v150
  %v152 = vpop.f32.mrb[0].mxu0
  %153 = vmatprep.mubr.f32.mxu0 0.0
  %154 = vmatmul.mubr.f32.gmra.mrb[0].mxu0 %v56
  %v155 = vpop.f32.mrb[0].mxu0
  %v156 = vadd.f32 %v37, %v155
  %v157 = vpop.f32.mrb[0].mxu0
  %158 = vmatprep.mubr.f32.mxu0 0.0
  %159 = vmatmul.mubr.f32.gmra.mrb[0].mxu0 %v59
  %v160 = vpop.f32.mrb[0].mxu0
  %v161 = vadd.f32 %v37, %v160
  %v162 = vpop.f32.mrb[0].mxu0
  %163 = vmatprep.mubr.f32.mxu0 0.0
  %164 = vmatmul.mubr.f32.gmra.mrb[0].mxu0 %v62
  %v165 = vpop.f32.mrb[0].mxu0
  %v166 = vadd.f32 %v37, %v165
  %v167 = vpop.f32.mrb[0].mxu0
  %168 = vdwg.mxu0
  %v169 = vld [vmem:[%s2] sm:$0xff]
  %v170 = vld [vmem:[%s2 + $0x8] sm:$0xff]
  %v171 = vld [vmem:[%s2 + $0x10] sm:$0xff]
  %v172 = vld [vmem:[%s2 + $0x18] sm:$0xff]
  %v173 = vlaneseq
  %v174 = vand.u32 %v173, 127
  %vm175 = vcmp.ge.s32.totalorder %v174, 64
  %vm176 = vcmp.lt.s32.totalorder %v174, 96
  %vm177 = vmand %vm175, %vm176
  %vm178 = vcmask 261120
  %v180 = vsel %vm178, 0.0, 0
  %182 = vmatprep.subr.mxu0 0.0
  %183 = vmatpush1.msra.mxu0 %v169
  %184 = vmatprep.subr.mxu0 0.0
  %185 = vmatpush1.msra.mxu0 %v170
  %186 = vmatprep.subr.mxu0 0.0
  %187 = vmatpush1.msra.mxu0 %v171
  %188 = vmatprep.subr.mxu0 0.0
  %189 = vmatpush1.msra.mxu0 %v172
  %190 = vmatprep.subr.mxu0 0.0
  %191 = vmatpush1.msra.mxu0 0.0
  %192 = vmatprep.subr.mxu0 0.0
  %193 = vmatpush1.msra.mxu0 0.0
  %194 = vmatprep.subr.mxu0 0.0
  %195 = vmatpush1.msra.mxu0 0.0
  %196 = vmatprep.subr.mxu0 0.0
  %197 = vmatpush1.msra.mxu0 0.0
  %198 = vmatprep.subr.mxu0 0.0
  %199 = vmatpush1.msra.mxu0 0.0
  %200 = vmatprep.subr.mxu0 0.0
  %201 = vmatpush1.msra.mxu0 0.0
  %202 = vmatprep.subr.mxu0 0.0
  %203 = vmatpush1.msra.mxu0 0.0
  %204 = vmatprep.subr.mxu0 0.0
  %205 = vmatpush1.msra.mxu0 0.0
  %206 = vmatprep.subr.mxu0 0.0
  %207 = vmatpush1.msra.mxu0 0.0
  %208 = vmatprep.subr.mxu0 0.0
  %209 = vmatpush1.msra.mxu0 0.0
  %210 = vmatprep.subr.mxu0 0.0
  %211 = vmatpush1.msra.mxu0 0.0
  %212 = vmatprep.subr.mxu0 0.0
  %213 = vmatpush1.msra.mxu0 0.0
  %214 = vmatprep.subr.mxu0 0.0
  %215 = vmatpush1.msra.mxu0 0.0
  %216 = vmatprep.subr.mxu0 0.0
  %217 = vmatpush1.msra.mxu0 0.0
  %218 = vmatprep.subr.mxu0 0.0
  %219 = vmatpush1.msra.mxu0 0.0
  %220 = vmatprep.subr.mxu0 0.0
  %221 = vmatpush1.msra.mxu0 0.0
  %222 = vmatprep.subr.mxu0 0.0
  %223 = vmatpush1.msra.mxu0 0.0
  %224 = vmatprep.subr.mxu0 0.0
  %225 = vmatpush1.msra.mxu0 0.0
  %226 = vmatprep.subr.mxu0 0.0
  %227 = vmatpush1.msra.mxu0 0.0
  %228 = vmatprep.subr.mxu0 0.0
  %229 = vmatpush1.msra.mxu0 0.0
  %230 = vmatprep.subr.mxu0 0.0
  %231 = vmatpush1.msra.mxu0 0.0
  %232 = vmatprep.subr.mxu0 0.0
  %233 = vmatpush1.msra.mxu0 0.0
  %234 = vmatprep.subr.mxu0 0.0
  %235 = vmatpush1.msra.mxu0 0.0
  %236 = vmatprep.subr.mxu0 0.0
  %237 = vmatpush1.msra.mxu0 0.0
  %238 = vmatprep.subr.mxu0 0.0
  %239 = vmatpush1.msra.mxu0 0.0
  %240 = vmatprep.subr.mxu0 0.0
  %241 = vmatpush1.msra.mxu0 0.0
  %242 = vmatprep.subr.mxu0 0.0
  %243 = vmatpush1.msra.mxu0 0.0
  %244 = vmatprep.subr.mxu0 0.0
  %245 = vmatpush1.msra.mxu0 0.0
  %246 = vmatprep.mubr.f32.mxu0 0.0
  %247 = vmatmul.mubr.f32.gmra.mrb[0].mxu0 %v180
  %v248 = vpop.f32.mrb[0].mxu0
  %v249 = vadd.f32 0.0, %v248
  %v250 = vpop.f32.mrb[0].mxu0
  %251 = vdwg.mxu0
  %v252 = vadd.f32 %v131, %v249
  %v253 = vtanh.pop %v252
  %v254 = vxor.u32 %v252, 2147483648
  %v255 = vmul.f32 %v254, 1.442695
  %v256 = vpow.pop %v255
  %v257 = vadd.f32 %v256, 1.0
  %v258 = vrcp.pop %v257
  %v259 = vmul.f32 1.0, %v258
  %v260 = vsel %vm177, %v253, %v259
  %261 = vrot.lane.b32.xlu0 %v260, 96
  %v262 = vpop.permute.xlu0 %261
  %263 = vrot.lane.b32.xlu0 %v260, 64
  %v264 = vpop.permute.xlu0 %263
  %265 = vrot.lane.b32.xlu0 %v260, 32
  %v266 = vpop.permute.xlu0 %265
  %v267 = vmul.f32 %v262, 0.0
  %v268 = vmul.f32 %v260, %v264
  %v269 = vadd.f32 %v267, %v268
  %v270 = vtanh.pop %v269
  %v271 = vmul.f32 %v266, %v270
  %v273 = vsel %vm178, %v271, 0
  %275 = vmatprep.subr.mxu0 0.0
  %276 = vmatpush1.msra.mxu0 %v169
  %277 = vmatprep.subr.mxu0 0.0
  %278 = vmatpush1.msra.mxu0 %v170
  %279 = vmatprep.subr.mxu0 0.0
  %280 = vmatpush1.msra.mxu0 %v171
  %281 = vmatprep.subr.mxu0 0.0
  %282 = vmatpush1.msra.mxu0 %v172
  %283 = vmatprep.subr.mxu0 0.0
  %284 = vmatpush1.msra.mxu0 0.0
  %285 = vmatprep.subr.mxu0 0.0
  %286 = vmatpush1.msra.mxu0 0.0
  %287 = vmatprep.subr.mxu0 0.0
  %288 = vmatpush1.msra.mxu0 0.0
  %289 = vmatprep.subr.mxu0 0.0
  %290 = vmatpush1.msra.mxu0 0.0
  %291 = vmatprep.subr.mxu0 0.0
  %292 = vmatpush1.msra.mxu0 0.0
  %293 = vmatprep.subr.mxu0 0.0
  %294 = vmatpush1.msra.mxu0 0.0
  %295 = vmatprep.subr.mxu0 0.0
  %296 = vmatpush1.msra.mxu0 0.0
  %297 = vmatprep.subr.mxu0 0.0
  %298 = vmatpush1.msra.mxu0 0.0
  %299 = vmatprep.subr.mxu0 0.0
  %300 = vmatpush1.msra.mxu0 0.0
  %301 = vmatprep.subr.mxu0 0.0
  %302 = vmatpush1.msra.mxu0 0.0
  %303 = vmatprep.subr.mxu0 0.0
  %304 = vmatpush1.msra.mxu0 0.0
  %305 = vmatprep.subr.mxu0 0.0
  %306 = vmatpush1.msra.mxu0 0.0
  %307 = vmatprep.subr.mxu0 0.0
  %308 = vmatpush1.msra.mxu0 0.0
  %309 = vmatprep.subr.mxu0 0.0
  %310 = vmatpush1.msra.mxu0 0.0
  %311 = vmatprep.subr.mxu0 0.0
  %312 = vmatpush1.msra.mxu0 0.0
  %313 = vmatprep.subr.mxu0 0.0
  %314 = vmatpush1.msra.mxu0 0.0
  %315 = vmatprep.subr.mxu0 0.0
  %316 = vmatpush1.msra.mxu0 0.0
  %317 = vmatprep.subr.mxu0 0.0
  %318 = vmatpush1.msra.mxu0 0.0
  %319 = vmatprep.subr.mxu0 0.0
  %320 = vmatpush1.msra.mxu0 0.0
  %321 = vmatprep.subr.mxu0 0.0
  %322 = vmatpush1.msra.mxu0 0.0
  %323 = vmatprep.subr.mxu0 0.0
  %324 = vmatpush1.msra.mxu0 0.0
  %325 = vmatprep.subr.mxu0 0.0
  %326 = vmatpush1.msra.mxu0 0.0
  %327 = vmatprep.subr.mxu0 0.0
  %328 = vmatpush1.msra.mxu0 0.0
  %329 = vmatprep.subr.mxu0 0.0
  %330 = vmatpush1.msra.mxu0 0.0
  %331 = vmatprep.subr.mxu0 0.0
  %332 = vmatpush1.msra.mxu0 0.0
  %333 = vmatprep.subr.mxu0 0.0
  %334 = vmatpush1.msra.mxu0 0.0
  %335 = vmatprep.subr.mxu0 0.0
  %336 = vmatpush1.msra.mxu0 0.0
  %337 = vmatprep.subr.mxu0 0.0
  %338 = vmatpush1.msra.mxu0 0.0
  %339 = vmatprep.mubr.f32.mxu0 0.0
  %340 = vmatmul.mubr.f32.gmra.mrb[0].mxu0 %v273
  %v341 = vpop.f32.mrb[0].mxu0
  %v342 = vadd.f32 0.0, %v341
  %v343 = vpop.f32.mrb[0].mxu0
  %344 = vdwg.mxu0
  %v345 = vadd.f32 %v136, %v342
  %v346 = vtanh.pop %v345
  %v347 = vxor.u32 %v345, 2147483648
  %v348 = vmul.f32 %v347, 1.442695
  %v349 = vpow.pop %v348
  %v350 = vadd.f32 %v349, 1.0
  %v351 = vrcp.pop %v350
  %v352 = vmul.f32 1.0, %v351
  %v353 = vsel %vm177, %v346, %v352
  %354 = vrot.lane.b32.xlu0 %v353, 96
  %v355 = vpop.permute.xlu0 %354
  %356 = vrot.lane.b32.xlu0 %v353, 64
  %v357 = vpop.permute.xlu0 %356
  %358 = vrot.lane.b32.xlu0 %v353, 32
  %v359 = vpop.permute.xlu0 %358
  %v360 = vmul.f32 %v355, %v269
  %v361 = vmul.f32 %v353, %v357
  %v362 = vadd.f32 %v360, %v361
  %v363 = vtanh.pop %v362
  %v364 = vmul.f32 %v359, %v363
  %v366 = vsel %vm178, %v364, 0
  %368 = vmatprep.subr.mxu0 0.0
  %369 = vmatpush1.msra.mxu0 %v169
  %370 = vmatprep.subr.mxu0 0.0
  %371 = vmatpush1.msra.mxu0 %v170
  %372 = vmatprep.subr.mxu0 0.0
  %373 = vmatpush1.msra.mxu0 %v171
  %374 = vmatprep.subr.mxu0 0.0
  %375 = vmatpush1.msra.mxu0 %v172
  %376 = vmatprep.subr.mxu0 0.0
  %377 = vmatpush1.msra.mxu0 0.0
  %378 = vmatprep.subr.mxu0 0.0
  %379 = vmatpush1.msra.mxu0 0.0
  %380 = vmatprep.subr.mxu0 0.0
  %381 = vmatpush1.msra.mxu0 0.0
  %382 = vmatprep.subr.mxu0 0.0
  %383 = vmatpush1.msra.mxu0 0.0
  %384 = vmatprep.subr.mxu0 0.0
  %385 = vmatpush1.msra.mxu0 0.0
  %386 = vmatprep.subr.mxu0 0.0
  %387 = vmatpush1.msra.mxu0 0.0
  %388 = vmatprep.subr.mxu0 0.0
  %389 = vmatpush1.msra.mxu0 0.0
  %390 = vmatprep.subr.mxu0 0.0
  %391 = vmatpush1.msra.mxu0 0.0
  %392 = vmatprep.subr.mxu0 0.0
  %393 = vmatpush1.msra.mxu0 0.0
  %394 = vmatprep.subr.mxu0 0.0
  %395 = vmatpush1.msra.mxu0 0.0
  %396 = vmatprep.subr.mxu0 0.0
  %397 = vmatpush1.msra.mxu0 0.0
  %398 = vmatprep.subr.mxu0 0.0
  %399 = vmatpush1.msra.mxu0 0.0
  %400 = vmatprep.subr.mxu0 0.0
  %401 = vmatpush1.msra.mxu0 0.0
  %402 = vmatprep.subr.mxu0 0.0
  %403 = vmatpush1.msra.mxu0 0.0
  %404 = vmatprep.subr.mxu0 0.0
  %405 = vmatpush1.msra.mxu0 0.0
  %406 = vmatprep.subr.mxu0 0.0
  %407 = vmatpush1.msra.mxu0 0.0
  %408 = vmatprep.subr.mxu0 0.0
  %409 = vmatpush1.msra.mxu0 0.0
  %410 = vmatprep.subr.mxu0 0.0
  %411 = vmatpush1.msra.mxu0 0.0
  %412 = vmatprep.subr.mxu0 0.0
  %413 = vmatpush1.msra.mxu0 0.0
  %414 = vmatprep.subr.mxu0 0.0
  %415 = vmatpush1.msra.mxu0 0.0
  %416 = vmatprep.subr.mxu0 0.0
  %417 = vmatpush1.msra.mxu0 0.0
  %418 = vmatprep.subr.mxu0 0.0
  %419 = vmatpush1.msra.mxu0 0.0
  %420 = vmatprep.subr.mxu0 0.0
  %421 = vmatpush1.msra.mxu0 0.0
  %422 = vmatprep.subr.mxu0 0.0
  %423 = vmatpush1.msra.mxu0 0.0
  %424 = vmatprep.subr.mxu0 0.0
  %425 = vmatpush1.msra.mxu0 0.0
  %426 = vmatprep.subr.mxu0 0.0
  %427 = vmatpush1.msra.mxu0 0.0
  %428 = vmatprep.subr.mxu0 0.0
  %429 = vmatpush1.msra.mxu0 0.0
  %430 = vmatprep.subr.mxu0 0.0
  %431 = vmatpush1.msra.mxu0 0.0
  %432 = vmatprep.mubr.f32.mxu0 0.0
  %433 = vmatmul.mubr.f32.gmra.mrb[0].mxu0 %v366
  %v434 = vpop.f32.mrb[0].mxu0
  %v435 = vadd.f32 0.0, %v434
  %v436 = vpop.f32.mrb[0].mxu0
  %437 = vdwg.mxu0
  %v438 = vadd.f32 %v141, %v435
  %v439 = vtanh.pop %v438
  %v440 = vxor.u32 %v438, 2147483648
  %v441 = vmul.f32 %v440, 1.442695
  %v442 = vpow.pop %v441
  %v443 = vadd.f32 %v442, 1.0
  %v444 = vrcp.pop %v443
  %v445 = vmul.f32 1.0, %v444
  %v446 = vsel %vm177, %v439, %v445
  %447 = vrot.lane.b32.xlu0 %v446, 96
  %v448 = vpop.permute.xlu0 %447
  %449 = vrot.lane.b32.xlu0 %v446, 64
  %v450 = vpop.permute.xlu0 %449
  %451 = vrot.lane.b32.xlu0 %v446, 32
  %v452 = vpop.permute.xlu0 %451
  %v453 = vmul.f32 %v448, %v362
  %v454 = vmul.f32 %v446, %v450
  %v455 = vadd.f32 %v453, %v454
  %v456 = vtanh.pop %v455
  %v457 = vmul.f32 %v452, %v456
  %v459 = vsel %vm178, %v457, 0
  %461 = vmatprep.subr.mxu0 0.0
  %462 = vmatpush1.msra.mxu0 %v169
  %463 = vmatprep.subr.mxu0 0.0
  %464 = vmatpush1.msra.mxu0 %v170
  %465 = vmatprep.subr.mxu0 0.0
  %466 = vmatpush1.msra.mxu0 %v171
  %467 = vmatprep.subr.mxu0 0.0
  %468 = vmatpush1.msra.mxu0 %v172
  %469 = vmatprep.subr.mxu0 0.0
  %470 = vmatpush1.msra.mxu0 0.0
  %471 = vmatprep.subr.mxu0 0.0
  %472 = vmatpush1.msra.mxu0 0.0
  %473 = vmatprep.subr.mxu0 0.0
  %474 = vmatpush1.msra.mxu0 0.0
  %475 = vmatprep.subr.mxu0 0.0
  %476 = vmatpush1.msra.mxu0 0.0
  %477 = vmatprep.subr.mxu0 0.0
  %478 = vmatpush1.msra.mxu0 0.0
  %479 = vmatprep.subr.mxu0 0.0
  %480 = vmatpush1.msra.mxu0 0.0
  %481 = vmatprep.subr.mxu0 0.0
  %482 = vmatpush1.msra.mxu0 0.0
  %483 = vmatprep.subr.mxu0 0.0
  %484 = vmatpush1.msra.mxu0 0.0
  %485 = vmatprep.subr.mxu0 0.0
  %486 = vmatpush1.msra.mxu0 0.0
  %487 = vmatprep.subr.mxu0 0.0
  %488 = vmatpush1.msra.mxu0 0.0
  %489 = vmatprep.subr.mxu0 0.0
  %490 = vmatpush1.msra.mxu0 0.0
  %491 = vmatprep.subr.mxu0 0.0
  %492 = vmatpush1.msra.mxu0 0.0
  %493 = vmatprep.subr.mxu0 0.0
  %494 = vmatpush1.msra.mxu0 0.0
  %495 = vmatprep.subr.mxu0 0.0
  %496 = vmatpush1.msra.mxu0 0.0
  %497 = vmatprep.subr.mxu0 0.0
  %498 = vmatpush1.msra.mxu0 0.0
  %499 = vmatprep.subr.mxu0 0.0
  %500 = vmatpush1.msra.mxu0 0.0
  %501 = vmatprep.subr.mxu0 0.0
  %502 = vmatpush1.msra.mxu0 0.0
  %503 = vmatprep.subr.mxu0 0.0
  %504 = vmatpush1.msra.mxu0 0.0
  %505 = vmatprep.subr.mxu0 0.0
  %506 = vmatpush1.msra.mxu0 0.0
  %507 = vmatprep.subr.mxu0 0.0
  %508 = vmatpush1.msra.mxu0 0.0
  %509 = vmatprep.subr.mxu0 0.0
  %510 = vmatpush1.msra.mxu0 0.0
  %511 = vmatprep.subr.mxu0 0.0
  %512 = vmatpush1.msra.mxu0 0.0
  %513 = vmatprep.subr.mxu0 0.0
  %514 = vmatpush1.msra.mxu0 0.0
  %515 = vmatprep.subr.mxu0 0.0
  %516 = vmatpush1.msra.mxu0 0.0
  %517 = vmatprep.subr.mxu0 0.0
  %518 = vmatpush1.msra.mxu0 0.0
  %519 = vmatprep.subr.mxu0 0.0
  %520 = vmatpush1.msra.mxu0 0.0
  %521 = vmatprep.subr.mxu0 0.0
  %522 = vmatpush1.msra.mxu0 0.0
  %523 = vmatprep.subr.mxu0 0.0
  %524 = vmatpush1.msra.mxu0 0.0
  %525 = vmatprep.mubr.f32.mxu0 0.0
  %526 = vmatmul.mubr.f32.gmra.mrb[0].mxu0 %v459
  %v527 = vpop.f32.mrb[0].mxu0
  %v528 = vadd.f32 0.0, %v527
  %v529 = vpop.f32.mrb[0].mxu0
  %530 = vdwg.mxu0
  %v531 = vadd.f32 %v146, %v528
  %v532 = vtanh.pop %v531
  %v533 = vxor.u32 %v531, 2147483648
  %v534 = vmul.f32 %v533, 1.442695
  %v535 = vpow.pop %v534
  %v536 = vadd.f32 %v535, 1.0
  %v537 = vrcp.pop %v536
  %v538 = vmul.f32 1.0, %v537
  %v539 = vsel %vm177, %v532, %v538
  %540 = vrot.lane.b32.xlu0 %v539, 96
  %v541 = vpop.permute.xlu0 %540
  %542 = vrot.lane.b32.xlu0 %v539, 64
  %v543 = vpop.permute.xlu0 %542
  %544 = vrot.lane.b32.xlu0 %v539, 32
  %v545 = vpop.permute.xlu0 %544
  %v546 = vmul.f32 %v541, %v455
  %v547 = vmul.f32 %v539, %v543
  %v548 = vadd.f32 %v546, %v547
  %v549 = vtanh.pop %v548
  %v550 = vmul.f32 %v545, %v549
  %v552 = vsel %vm178, %v550, 0
  %554 = vmatprep.subr.mxu0 0.0
  %555 = vmatpush1.msra.mxu0 %v169
  %556 = vmatprep.subr.mxu0 0.0
  %557 = vmatpush1.msra.mxu0 %v170
  %558 = vmatprep.subr.mxu0 0.0
  %559 = vmatpush1.msra.mxu0 %v171
  %560 = vmatprep.subr.mxu0 0.0
  %561 = vmatpush1.msra.mxu0 %v172
  %562 = vmatprep.subr.mxu0 0.0
  %563 = vmatpush1.msra.mxu0 0.0
  %564 = vmatprep.subr.mxu0 0.0
  %565 = vmatpush1.msra.mxu0 0.0
  %566 = vmatprep.subr.mxu0 0.0
  %567 = vmatpush1.msra.mxu0 0.0
  %568 = vmatprep.subr.mxu0 0.0
  %569 = vmatpush1.msra.mxu0 0.0
  %570 = vmatprep.subr.mxu0 0.0
  %571 = vmatpush1.msra.mxu0 0.0
  %572 = vmatprep.subr.mxu0 0.0
  %573 = vmatpush1.msra.mxu0 0.0
  %574 = vmatprep.subr.mxu0 0.0
  %575 = vmatpush1.msra.mxu0 0.0
  %576 = vmatprep.subr.mxu0 0.0
  %577 = vmatpush1.msra.mxu0 0.0
  %578 = vmatprep.subr.mxu0 0.0
  %579 = vmatpush1.msra.mxu0 0.0
  %580 = vmatprep.subr.mxu0 0.0
  %581 = vmatpush1.msra.mxu0 0.0
  %582 = vmatprep.subr.mxu0 0.0
  %583 = vmatpush1.msra.mxu0 0.0
  %584 = vmatprep.subr.mxu0 0.0
  %585 = vmatpush1.msra.mxu0 0.0
  %586 = vmatprep.subr.mxu0 0.0
  %587 = vmatpush1.msra.mxu0 0.0
  %588 = vmatprep.subr.mxu0 0.0
  %589 = vmatpush1.msra.mxu0 0.0
  %590 = vmatprep.subr.mxu0 0.0
  %591 = vmatpush1.msra.mxu0 0.0
  %592 = vmatprep.subr.mxu0 0.0
  %593 = vmatpush1.msra.mxu0 0.0
  %594 = vmatprep.subr.mxu0 0.0
  %595 = vmatpush1.msra.mxu0 0.0
  %596 = vmatprep.subr.mxu0 0.0
  %597 = vmatpush1.msra.mxu0 0.0
  %598 = vmatprep.subr.mxu0 0.0
  %599 = vmatpush1.msra.mxu0 0.0
  %600 = vmatprep.subr.mxu0 0.0
  %601 = vmatpush1.msra.mxu0 0.0
  %602 = vmatprep.subr.mxu0 0.0
  %603 = vmatpush1.msra.mxu0 0.0
  %604 = vmatprep.subr.mxu0 0.0
  %605 = vmatpush1.msra.mxu0 0.0
  %606 = vmatprep.subr.mxu0 0.0
  %607 = vmatpush1.msra.mxu0 0.0
  %608 = vmatprep.subr.mxu0 0.0
  %609 = vmatpush1.msra.mxu0 0.0
  %610 = vmatprep.subr.mxu0 0.0
  %611 = vmatpush1.msra.mxu0 0.0
  %612 = vmatprep.subr.mxu0 0.0
  %613 = vmatpush1.msra.mxu0 0.0
  %614 = vmatprep.subr.mxu0 0.0
  %615 = vmatpush1.msra.mxu0 0.0
  %616 = vmatprep.subr.mxu0 0.0
  %617 = vmatpush1.msra.mxu0 0.0
  %618 = vmatprep.mubr.f32.mxu0 0.0
  %619 = vmatmul.mubr.f32.gmra.mrb[0].mxu0 %v552
  %v620 = vpop.f32.mrb[0].mxu0
  %v621 = vadd.f32 0.0, %v620
  %v622 = vpop.f32.mrb[0].mxu0
  %623 = vdwg.mxu0
  %v624 = vadd.f32 %v151, %v621
  %v625 = vtanh.pop %v624
  %v626 = vxor.u32 %v624, 2147483648
  %v627 = vmul.f32 %v626, 1.442695
  %v628 = vpow.pop %v627
  %v629 = vadd.f32 %v628, 1.0
  %v630 = vrcp.pop %v629
  %v631 = vmul.f32 1.0, %v630
  %v632 = vsel %vm177, %v625, %v631
  %633 = vrot.lane.b32.xlu0 %v632, 96
  %v634 = vpop.permute.xlu0 %633
  %635 = vrot.lane.b32.xlu0 %v632, 64
  %v636 = vpop.permute.xlu0 %635
  %637 = vrot.lane.b32.xlu0 %v632, 32
  %v638 = vpop.permute.xlu0 %637
  %v639 = vmul.f32 %v634, %v548
  %v640 = vmul.f32 %v632, %v636
  %v641 = vadd.f32 %v639, %v640
  %v642 = vtanh.pop %v641
  %v643 = vmul.f32 %v638, %v642
  %v645 = vsel %vm178, %v643, 0
  %647 = vmatprep.subr.mxu0 0.0
  %648 = vmatpush1.msra.mxu0 %v169
  %649 = vmatprep.subr.mxu0 0.0
  %650 = vmatpush1.msra.mxu0 %v170
  %651 = vmatprep.subr.mxu0 0.0
  %652 = vmatpush1.msra.mxu0 %v171
  %653 = vmatprep.subr.mxu0 0.0
  %654 = vmatpush1.msra.mxu0 %v172
  %655 = vmatprep.subr.mxu0 0.0
  %656 = vmatpush1.msra.mxu0 0.0
  %657 = vmatprep.subr.mxu0 0.0
  %658 = vmatpush1.msra.mxu0 0.0
  %659 = vmatprep.subr.mxu0 0.0
  %660 = vmatpush1.msra.mxu0 0.0
  %661 = vmatprep.subr.mxu0 0.0
  %662 = vmatpush1.msra.mxu0 0.0
  %663 = vmatprep.subr.mxu0 0.0
  %664 = vmatpush1.msra.mxu0 0.0
  %665 = vmatprep.subr.mxu0 0.0
  %666 = vmatpush1.msra.mxu0 0.0
  %667 = vmatprep.subr.mxu0 0.0
  %668 = vmatpush1.msra.mxu0 0.0
  %669 = vmatprep.subr.mxu0 0.0
  %670 = vmatpush1.msra.mxu0 0.0
  %671 = vmatprep.subr.mxu0 0.0
  %672 = vmatpush1.msra.mxu0 0.0
  %673 = vmatprep.subr.mxu0 0.0
  %674 = vmatpush1.msra.mxu0 0.0
  %675 = vmatprep.subr.mxu0 0.0
  %676 = vmatpush1.msra.mxu0 0.0
  %677 = vmatprep.subr.mxu0 0.0
  %678 = vmatpush1.msra.mxu0 0.0
  %679 = vmatprep.subr.mxu0 0.0
  %680 = vmatpush1.msra.mxu0 0.0
  %681 = vmatprep.subr.mxu0 0.0
  %682 = vmatpush1.msra.mxu0 0.0
  %683 = vmatprep.subr.mxu0 0.0
  %684 = vmatpush1.msra.mxu0 0.0
  %685 = vmatprep.subr.mxu0 0.0
  %686 = vmatpush1.msra.mxu0 0.0
  %687 = vmatprep.subr.mxu0 0.0
  %688 = vmatpush1.msra.mxu0 0.0
  %689 = vmatprep.subr.mxu0 0.0
  %690 = vmatpush1.msra.mxu0 0.0
  %691 = vmatprep.subr.mxu0 0.0
  %692 = vmatpush1.msra.mxu0 0.0
  %693 = vmatprep.subr.mxu0 0.0
  %694 = vmatpush1.msra.mxu0 0.0
  %695 = vmatprep.subr.mxu0 0.0
  %696 = vmatpush1.msra.mxu0 0.0
  %697 = vmatprep.subr.mxu0 0.0
  %698 = vmatpush1.msra.mxu0 0.0
  %699 = vmatprep.subr.mxu0 0.0
  %700 = vmatpush1.msra.mxu0 0.0
  %701 = vmatprep.subr.mxu0 0.0
  %702 = vmatpush1.msra.mxu0 0.0
  %703 = vmatprep.subr.mxu0 0.0
  %704 = vmatpush1.msra.mxu0 0.0
  %705 = vmatprep.subr.mxu0 0.0
  %706 = vmatpush1.msra.mxu0 0.0
  %707 = vmatprep.subr.mxu0 0.0
  %708 = vmatpush1.msra.mxu0 0.0
  %709 = vmatprep.subr.mxu0 0.0
  %710 = vmatpush1.msra.mxu0 0.0
  %711 = vmatprep.mubr.f32.mxu0 0.0
  %712 = vmatmul.mubr.f32.gmra.mrb[0].mxu0 %v645
  %v713 = vpop.f32.mrb[0].mxu0
  %v714 = vadd.f32 0.0, %v713
  %v715 = vpop.f32.mrb[0].mxu0
  %716 = vdwg.mxu0
  %v717 = vadd.f32 %v156, %v714
  %v718 = vtanh.pop %v717
  %v719 = vxor.u32 %v717, 2147483648
  %v720 = vmul.f32 %v719, 1.442695
  %v721 = vpow.pop %v720
  %v722 = vadd.f32 %v721, 1.0
  %v723 = vrcp.pop %v722
  %v724 = vmul.f32 1.0, %v723
  %v725 = vsel %vm177, %v718, %v724
  %726 = vrot.lane.b32.xlu0 %v725, 96
  %v727 = vpop.permute.xlu0 %726
  %728 = vrot.lane.b32.xlu0 %v725, 64
  %v729 = vpop.permute.xlu0 %728
  %730 = vrot.lane.b32.xlu0 %v725, 32
  %v731 = vpop.permute.xlu0 %730
  %v732 = vmul.f32 %v727, %v641
  %v733 = vmul.f32 %v725, %v729
  %v734 = vadd.f32 %v732, %v733
  %v735 = vtanh.pop %v734
  %v736 = vmul.f32 %v731, %v735
  %v738 = vsel %vm178, %v736, 0
  %740 = vmatprep.subr.mxu0 0.0
  %741 = vmatpush1.msra.mxu0 %v169
  %742 = vmatprep.subr.mxu0 0.0
  %743 = vmatpush1.msra.mxu0 %v170
  %744 = vmatprep.subr.mxu0 0.0
  %745 = vmatpush1.msra.mxu0 %v171
  %746 = vmatprep.subr.mxu0 0.0
  %747 = vmatpush1.msra.mxu0 %v172
  %748 = vmatprep.subr.mxu0 0.0
  %749 = vmatpush1.msra.mxu0 0.0
  %750 = vmatprep.subr.mxu0 0.0
  %751 = vmatpush1.msra.mxu0 0.0
  %752 = vmatprep.subr.mxu0 0.0
  %753 = vmatpush1.msra.mxu0 0.0
  %754 = vmatprep.subr.mxu0 0.0
  %755 = vmatpush1.msra.mxu0 0.0
  %756 = vmatprep.subr.mxu0 0.0
  %757 = vmatpush1.msra.mxu0 0.0
  %758 = vmatprep.subr.mxu0 0.0
  %759 = vmatpush1.msra.mxu0 0.0
  %760 = vmatprep.subr.mxu0 0.0
  %761 = vmatpush1.msra.mxu0 0.0
  %762 = vmatprep.subr.mxu0 0.0
  %763 = vmatpush1.msra.mxu0 0.0
  %764 = vmatprep.subr.mxu0 0.0
  %765 = vmatpush1.msra.mxu0 0.0
  %766 = vmatprep.subr.mxu0 0.0
  %767 = vmatpush1.msra.mxu0 0.0
  %768 = vmatprep.subr.mxu0 0.0
  %769 = vmatpush1.msra.mxu0 0.0
  %770 = vmatprep.subr.mxu0 0.0
  %771 = vmatpush1.msra.mxu0 0.0
  %772 = vmatprep.subr.mxu0 0.0
  %773 = vmatpush1.msra.mxu0 0.0
  %774 = vmatprep.subr.mxu0 0.0
  %775 = vmatpush1.msra.mxu0 0.0
  %776 = vmatprep.subr.mxu0 0.0
  %777 = vmatpush1.msra.mxu0 0.0
  %778 = vmatprep.subr.mxu0 0.0
  %779 = vmatpush1.msra.mxu0 0.0
  %780 = vmatprep.subr.mxu0 0.0
  %781 = vmatpush1.msra.mxu0 0.0
  %782 = vmatprep.subr.mxu0 0.0
  %783 = vmatpush1.msra.mxu0 0.0
  %784 = vmatprep.subr.mxu0 0.0
  %785 = vmatpush1.msra.mxu0 0.0
  %786 = vmatprep.subr.mxu0 0.0
  %787 = vmatpush1.msra.mxu0 0.0
  %788 = vmatprep.subr.mxu0 0.0
  %789 = vmatpush1.msra.mxu0 0.0
  %790 = vmatprep.subr.mxu0 0.0
  %791 = vmatpush1.msra.mxu0 0.0
  %792 = vmatprep.subr.mxu0 0.0
  %793 = vmatpush1.msra.mxu0 0.0
  %794 = vmatprep.subr.mxu0 0.0
  %795 = vmatpush1.msra.mxu0 0.0
  %796 = vmatprep.subr.mxu0 0.0
  %797 = vmatpush1.msra.mxu0 0.0
  %798 = vmatprep.subr.mxu0 0.0
  %799 = vmatpush1.msra.mxu0 0.0
  %800 = vmatprep.subr.mxu0 0.0
  %801 = vmatpush1.msra.mxu0 0.0
  %802 = vmatprep.subr.mxu0 0.0
  %803 = vmatpush1.msra.mxu0 0.0
  %804 = vmatprep.mubr.f32.mxu0 0.0
  %805 = vmatmul.mubr.f32.gmra.mrb[0].mxu0 %v738
  %v806 = vpop.f32.mrb[0].mxu0
  %v807 = vadd.f32 0.0, %v806
  %v808 = vpop.f32.mrb[0].mxu0
  %809 = vdwg.mxu0
  %v810 = vadd.f32 %v161, %v807
  %v811 = vtanh.pop %v810
  %v812 = vxor.u32 %v810, 2147483648
  %v813 = vmul.f32 %v812, 1.442695
  %v814 = vpow.pop %v813
  %v815 = vadd.f32 %v814, 1.0
  %v816 = vrcp.pop %v815
  %v817 = vmul.f32 1.0, %v816
  %v818 = vsel %vm177, %v811, %v817
  %819 = vrot.lane.b32.xlu0 %v818, 96
  %v820 = vpop.permute.xlu0 %819
  %821 = vrot.lane.b32.xlu0 %v818, 64
  %v822 = vpop.permute.xlu0 %821
  %823 = vrot.lane.b32.xlu0 %v818, 32
  %v824 = vpop.permute.xlu0 %823
  %v825 = vmul.f32 %v820, %v734
  %v826 = vmul.f32 %v818, %v822
  %v827 = vadd.f32 %v825, %v826
  %v828 = vtanh.pop %v827
  %v829 = vmul.f32 %v824, %v828
  %v831 = vsel %vm178, %v829, 0
  %833 = vmatprep.subr.mxu0 0.0
  %834 = vmatpush1.msra.mxu0 %v169
  %835 = vmatprep.subr.mxu0 0.0
  %836 = vmatpush1.msra.mxu0 %v170
  %837 = vmatprep.subr.mxu0 0.0
  %838 = vmatpush1.msra.mxu0 %v171
  %839 = vmatprep.subr.mxu0 0.0
  %840 = vmatpush1.msra.mxu0 %v172
  %841 = vmatprep.subr.mxu0 0.0
  %842 = vmatpush1.msra.mxu0 0.0
  %843 = vmatprep.subr.mxu0 0.0
  %844 = vmatpush1.msra.mxu0 0.0
  %845 = vmatprep.subr.mxu0 0.0
  %846 = vmatpush1.msra.mxu0 0.0
  %847 = vmatprep.subr.mxu0 0.0
  %848 = vmatpush1.msra.mxu0 0.0
  %849 = vmatprep.subr.mxu0 0.0
  %850 = vmatpush1.msra.mxu0 0.0
  %851 = vmatprep.subr.mxu0 0.0
  %852 = vmatpush1.msra.mxu0 0.0
  %853 = vmatprep.subr.mxu0 0.0
  %854 = vmatpush1.msra.mxu0 0.0
  %855 = vmatprep.subr.mxu0 0.0
  %856 = vmatpush1.msra.mxu0 0.0
  %857 = vmatprep.subr.mxu0 0.0
  %858 = vmatpush1.msra.mxu0 0.0
  %859 = vmatprep.subr.mxu0 0.0
  %860 = vmatpush1.msra.mxu0 0.0
  %861 = vmatprep.subr.mxu0 0.0
  %862 = vmatpush1.msra.mxu0 0.0
  %863 = vmatprep.subr.mxu0 0.0
  %864 = vmatpush1.msra.mxu0 0.0
  %865 = vmatprep.subr.mxu0 0.0
  %866 = vmatpush1.msra.mxu0 0.0
  %867 = vmatprep.subr.mxu0 0.0
  %868 = vmatpush1.msra.mxu0 0.0
  %869 = vmatprep.subr.mxu0 0.0
  %870 = vmatpush1.msra.mxu0 0.0
  %871 = vmatprep.subr.mxu0 0.0
  %872 = vmatpush1.msra.mxu0 0.0
  %873 = vmatprep.subr.mxu0 0.0
  %874 = vmatpush1.msra.mxu0 0.0
  %875 = vmatprep.subr.mxu0 0.0
  %876 = vmatpush1.msra.mxu0 0.0
  %877 = vmatprep.subr.mxu0 0.0
  %878 = vmatpush1.msra.mxu0 0.0
  %879 = vmatprep.subr.mxu0 0.0
  %880 = vmatpush1.msra.mxu0 0.0
  %881 = vmatprep.subr.mxu0 0.0
  %882 = vmatpush1.msra.mxu0 0.0
  %883 = vmatprep.subr.mxu0 0.0
  %884 = vmatpush1.msra.mxu0 0.0
  %885 = vmatprep.subr.mxu0 0.0
  %886 = vmatpush1.msra.mxu0 0.0
  %887 = vmatprep.subr.mxu0 0.0
  %888 = vmatpush1.msra.mxu0 0.0
  %889 = vmatprep.subr.mxu0 0.0
  %890 = vmatpush1.msra.mxu0 0.0
  %891 = vmatprep.subr.mxu0 0.0
  %892 = vmatpush1.msra.mxu0 0.0
  %893 = vmatprep.subr.mxu0 0.0
  %894 = vmatpush1.msra.mxu0 0.0
  %895 = vmatprep.subr.mxu0 0.0
  %896 = vmatpush1.msra.mxu0 0.0
  %897 = vmatprep.mubr.f32.mxu0 0.0
  %898 = vmatmul.mubr.f32.gmra.mrb[0].mxu0 %v831
  %v899 = vpop.f32.mrb[0].mxu0
  %v900 = vadd.f32 0.0, %v899
  %v901 = vpop.f32.mrb[0].mxu0
  %902 = vdwg.mxu0
  %v903 = vadd.f32 %v166, %v900
  %v904 = vtanh.pop %v903
  %v905 = vxor.u32 %v903, 2147483648
  %v906 = vmul.f32 %v905, 1.442695
  %v907 = vpow.pop %v906
  %v908 = vadd.f32 %v907, 1.0
  %v909 = vrcp.pop %v908
  %v910 = vmul.f32 1.0, %v909
  %v911 = vsel %vm177, %v904, %v910
  %912 = vrot.lane.b32.xlu0 %v911, 96
  %v913 = vpop.permute.xlu0 %912
  %914 = vrot.lane.b32.xlu0 %v911, 64
  %v915 = vpop.permute.xlu0 %914
  %916 = vrot.lane.b32.xlu0 %v911, 32
  %v917 = vpop.permute.xlu0 %916
  %v918 = vmul.f32 %v913, %v827
  %v919 = vmul.f32 %v911, %v915
  %v920 = vadd.f32 %v918, %v919
  %v921 = vtanh.pop %v920
  %v922 = vmul.f32 %v917, %v921
  %v923 = vld [vmem:[%s4] sm:$0xff]
  %v924 = vld [vmem:[%s4 + $0x8] sm:$0xff]
  %v925 = vld [vmem:[%s4 + $0x10] sm:$0xff]
  %v926 = vld [vmem:[%s4 + $0x18] sm:$0xff]
  %v927 = vld [vmem:[%s5] sm:$0x1]
  %v929 = vlaneseq
  %v930 = vshrl.u32 %v929, 7
  %v931 = vsub.s32 0, %v930
  %v932 = vrot.slane %v927, %v931
  %v935 = vsel %vm178, %v922, 0
  %937 = vmatprep.subr.mxu0 0.0
  %938 = vmatpush1.msra.mxu0 %v923
  %939 = vmatprep.subr.mxu0 0.0
  %940 = vmatpush1.msra.mxu0 %v924
  %941 = vmatprep.subr.mxu0 0.0
  %942 = vmatpush1.msra.mxu0 %v925
  %943 = vmatprep.subr.mxu0 0.0
  %944 = vmatpush1.msra.mxu0 %v926
  %945 = vmatprep.subr.mxu0 0.0
  %946 = vmatpush1.msra.mxu0 0.0
  %947 = vmatprep.subr.mxu0 0.0
  %948 = vmatpush1.msra.mxu0 0.0
  %949 = vmatprep.subr.mxu0 0.0
  %950 = vmatpush1.msra.mxu0 0.0
  %951 = vmatprep.subr.mxu0 0.0
  %952 = vmatpush1.msra.mxu0 0.0
  %953 = vmatprep.subr.mxu0 0.0
  %954 = vmatpush1.msra.mxu0 0.0
  %955 = vmatprep.subr.mxu0 0.0
  %956 = vmatpush1.msra.mxu0 0.0
  %957 = vmatprep.subr.mxu0 0.0
  %958 = vmatpush1.msra.mxu0 0.0
  %959 = vmatprep.subr.mxu0 0.0
  %960 = vmatpush1.msra.mxu0 0.0
  %961 = vmatprep.subr.mxu0 0.0
  %962 = vmatpush1.msra.mxu0 0.0
  %963 = vmatprep.subr.mxu0 0.0
  %964 = vmatpush1.msra.mxu0 0.0
  %965 = vmatprep.subr.mxu0 0.0
  %966 = vmatpush1.msra.mxu0 0.0
  %967 = vmatprep.subr.mxu0 0.0
  %968 = vmatpush1.msra.mxu0 0.0
  %969 = vmatprep.subr.mxu0 0.0
  %970 = vmatpush1.msra.mxu0 0.0
  %971 = vmatprep.subr.mxu0 0.0
  %972 = vmatpush1.msra.mxu0 0.0
  %973 = vmatprep.subr.mxu0 0.0
  %974 = vmatpush1.msra.mxu0 0.0
  %975 = vmatprep.subr.mxu0 0.0
  %976 = vmatpush1.msra.mxu0 0.0
  %977 = vmatprep.subr.mxu0 0.0
  %978 = vmatpush1.msra.mxu0 0.0
  %979 = vmatprep.subr.mxu0 0.0
  %980 = vmatpush1.msra.mxu0 0.0
  %981 = vmatprep.subr.mxu0 0.0
  %982 = vmatpush1.msra.mxu0 0.0
  %983 = vmatprep.subr.mxu0 0.0
  %984 = vmatpush1.msra.mxu0 0.0
  %985 = vmatprep.subr.mxu0 0.0
  %986 = vmatpush1.msra.mxu0 0.0
  %987 = vmatprep.subr.mxu0 0.0
  %988 = vmatpush1.msra.mxu0 0.0
  %989 = vmatprep.subr.mxu0 0.0
  %990 = vmatpush1.msra.mxu0 0.0
  %991 = vmatprep.subr.mxu0 0.0
  %992 = vmatpush1.msra.mxu0 0.0
  %993 = vmatprep.subr.mxu0 0.0
  %994 = vmatpush1.msra.mxu0 0.0
  %995 = vmatprep.subr.mxu0 0.0
  %996 = vmatpush1.msra.mxu0 0.0
  %997 = vmatprep.subr.mxu0 0.0
  %998 = vmatpush1.msra.mxu0 0.0
  %999 = vmatprep.subr.mxu0 0.0
  %1000 = vmatpush1.msra.mxu0 0.0
  %1001 = vmatprep.mubr.f32.mxu0 0.0
  %1002 = vmatmul.mubr.f32.gmra.mrb[0].mxu0 %v935
  %v1003 = vpop.f32.mrb[0].mxu0
  %v1004 = vadd.f32 %v932, %v1003
  %v1005 = vpop.f32.mrb[0].mxu0
  %1006 = vdwg.mxu0
  %1007 = vst [vmem:[%s6] sm:$0xff] %v1004
  // Predicated region
  $region26: #{_lambda_.1} parent=0 // pred_check
    _
  $region27: #{_lambda_.1} parent=0 // pred_check_branch
    %1009 = sbr.rel (0) target = $region29
  $region28: #{_lambda_.1} parent=0 // pred_region
    _
  $region29: #{_lambda_.1} parent=0 // pred_fallthru
    _
  // Predicated region
  $region30: #{_lambda_.1} parent=0 // pred_check
    _
  $region31: #{_lambda_.1} parent=0 // pred_check_branch
    %1011 = sbr.rel (0) target = $region33
  $region32: #{_lambda_.1} parent=0 // pred_region
    _
  $region33: #{_lambda_.1} parent=0 // pred_fallthru
    _

</llo_original>
